<compile_context>
chip_gen: v6e
topology: v6e:2x2x1
jax: 0.10.0
libtpu: 0.0.40
codegen_flags: <defaults>
</compile_context>

<pallas_src>
import jax
import jax.numpy as jnp
from jax.experimental import pallas as pl
from jax.experimental.pallas import tpu as pltpu


def _make_kernel(C, H, W, P):
    """Build the BasicBlock kernel for static (C, H, W) and flat pad width P."""
    HW = H * W

    def kernel(x_ref, w1_ref, s1_ref, b1_ref, w2_ref, s2_ref, b2_ref,
               o_ref, xpad_ref):
        # x_ref / o_ref : (1, C, HW) f32
        # w*_ref        : (C, 9C)    bf16   (im2col-folded conv weights)
        # s*/b*_ref     : (C, 1)     f32    (folded BN scale / bias)
        # xpad_ref      : (C, HW + 2P) f32 VMEM scratch (flat zero-padded image)

        # Zero the flat pad borders once; only the interior is rewritten below,
        # so the borders stay zero for both convs.
        xpad_ref[:, 0:P] = jnp.zeros((C, P), jnp.float32)
        xpad_ref[:, P + HW:P + HW + P] = jnp.zeros((C, P), jnp.float32)

        # Column masks for the horizontal taps.  Row overflow is handled by the
        # flat zero padding; only column wrap-around needs masking.
        col = jax.lax.broadcasted_iota(jnp.int32, (1, HW), 1) % W
        mask_l = col != 0          # tap kw=0 (dw=-1) invalid at w == 0
        mask_r = col != (W - 1)    # tap kw=2 (dw=+1) invalid at w == W-1

        def conv_bn(w_ref, s_ref, b_ref):
            # Build the (9C, HW) im2col patch matrix from nine shifted
            # lane-slices of the padded scratch, then one bf16 MXU matmul with
            # f32 accumulation, then the folded BN affine.
            taps = []
            for kh in range(3):
                for kw in range(3):
                    s = (kh - 1) * W + (kw - 1)
                    t = xpad_ref[:, P + s:P + s + HW]          # (C, HW) f32
                    if kw == 0:
                        t = jnp.where(mask_l, t, 0.0)
                    elif kw == 2:
                        t = jnp.where(mask_r, t, 0.0)
                    taps.append(t)
            patches = jnp.concatenate(taps, axis=0).astype(jnp.bfloat16)
            acc = jnp.dot(w_ref[...], patches,
                          preferred_element_type=jnp.float32)  # (C, HW) f32
            return acc * s_ref[...] + b_ref[...]

        # conv1 -> bn1 -> relu
        xpad_ref[:, P:P + HW] = x_ref[0]
        out = jnp.maximum(conv_bn(w1_ref, s1_ref, b1_ref), 0.0)

        # conv2 -> bn2
        xpad_ref[:, P:P + HW] = out
        out = conv_bn(w2_ref, s2_ref, b2_ref)

        # residual add (identity re-read from the resident input block) + relu
        o_ref[0] = jnp.maximum(out + x_ref[0], 0.0).astype(o_ref.dtype)

    return kernel


def basic_block_forward(x_nchw, w1, g1, be1, m1, v1, w2, g2, be2, m2, v2,
                        eps=1e-5):
    """BasicBlock forward (stride=1, downsample=None), eval-mode BatchNorm.

    x_nchw: (B, C, H, W) float32.  Conv weights in torch layout (Cout, Cin, 3, 3).
    Returns (B, C, H, W) float32.
    """
    B, C, H, W = x_nchw.shape
    HW = H * W
    # Flat pad width: >= W+1 (so every tap offset is non-negative), rounded up
    # to a lane tile so the interior write / central tap stay lane-aligned.
    P = ((W + 1 + 127) // 128) * 128

    # Free reshape of contiguous NCHW -- no transpose, no extra HBM traffic.
    x = x_nchw.reshape(B, C, HW)

    def fold_conv_weight(w):
        # (Cout, Cin, 3, 3) -> (Cout, 9*Cin); patch rows are ordered (kh, kw)
        # major with cin minor, matching the in-kernel concatenation order.
        return jnp.transpose(w, (0, 2, 3, 1)).reshape(C, 9 * C).astype(jnp.bfloat16)

    w1_k = fold_conv_weight(w1)
    w2_k = fold_conv_weight(w2)

    inv1 = g1 * jax.lax.rsqrt(v1 + eps)
    inv2 = g2 * jax.lax.rsqrt(v2 + eps)
    s1 = inv1.reshape(C, 1)
    b1 = (be1 - m1 * inv1).reshape(C, 1)
    s2 = inv2.reshape(C, 1)
    b2 = (be2 - m2 * inv2).reshape(C, 1)

    kernel = _make_kernel(C, H, W, P)

    out = pl.pallas_call(
        kernel,
        out_shape=jax.ShapeDtypeStruct((B, C, HW), x.dtype),
        grid_spec=pltpu.PrefetchScalarGridSpec(
            num_scalar_prefetch=0,
            grid=(B,),
            in_specs=[
                pl.BlockSpec((1, C, HW), lambda b: (b, 0, 0)),   # x
                pl.BlockSpec((C, 9 * C), lambda b: (0, 0)),      # w1 (constant idx)
                pl.BlockSpec((C, 1), lambda b: (0, 0)),          # bn1 scale
                pl.BlockSpec((C, 1), lambda b: (0, 0)),          # bn1 bias
                pl.BlockSpec((C, 9 * C), lambda b: (0, 0)),      # w2 (constant idx)
                pl.BlockSpec((C, 1), lambda b: (0, 0)),          # bn2 scale
                pl.BlockSpec((C, 1), lambda b: (0, 0)),          # bn2 bias
            ],
            out_specs=pl.BlockSpec((1, C, HW), lambda b: (b, 0, 0)),
            scratch_shapes=[pltpu.VMEM((C, HW + 2 * P), jnp.float32)],
        ),
        compiler_params=pltpu.CompilerParams(
            dimension_semantics=("parallel",)),
    )(x, w1_k, s1, b1, w2_k, s2, b2)

    return out.reshape(B, C, H, W)


def _reference(x_nchw, w1, g1, be1, m1, v1, w2, g2, be2, m2, v2, eps=1e-5):
    """Pure-JAX (XLA, f32) reference for the same forward pass."""
    def conv(x, w):
        return jax.lax.conv_general_dilated(
            x, w, window_strides=(1, 1), padding=((1, 1), (1, 1)),
            dimension_numbers=("NCHW", "OIHW", "NCHW"))

    def bn(x, g, b, m, v):
        sc = (g / jnp.sqrt(v + eps)).reshape(1, -1, 1, 1)
        bi = (b - m * g / jnp.sqrt(v + eps)).reshape(1, -1, 1, 1)
        return x * sc + bi

    out = jax.nn.relu(bn(conv(x_nchw, w1), g1, be1, m1, v1))
    out = bn(conv(out, w2), g2, be2, m2, v2)
    return jax.nn.relu(out + x_nchw)


if __name__ == "__main__":
    key = jax.random.PRNGKey(0)
    B, C, H, W = 2, 4, 16, 16   # inplanes = planes = 4, stride = 1

    ks = jax.random.split(key, 12)
    x = jax.random.normal(ks[0], (B, C, H, W), jnp.float32)

    w1 = 0.1 * jax.random.normal(ks[1], (C, C, 3, 3), jnp.float32)
    w2 = 0.1 * jax.random.normal(ks[2], (C, C, 3, 3), jnp.float32)

    g1 = 1.0 + 0.1 * jax.random.normal(ks[3], (C,), jnp.float32)
    be1 = 0.1 * jax.random.normal(ks[4], (C,), jnp.float32)
    m1 = 0.1 * jax.random.normal(ks[5], (C,), jnp.float32)
    v1 = jnp.abs(jax.random.normal(ks[6], (C,), jnp.float32)) + 0.5

    g2 = 1.0 + 0.1 * jax.random.normal(ks[7], (C,), jnp.float32)
    be2 = 0.1 * jax.random.normal(ks[8], (C,), jnp.float32)
    m2 = 0.1 * jax.random.normal(ks[9], (C,), jnp.float32)
    v2 = jnp.abs(jax.random.normal(ks[10], (C,), jnp.float32)) + 0.5

    out = basic_block_forward(x, w1, g1, be1, m1, v1, w2, g2, be2, m2, v2)
    out = jax.block_until_ready(out)

    ref = _reference(x, w1, g1, be1, m1, v1, w2, g2, be2, m2, v2)
    assert out.shape == (B, C, H, W)
    assert jnp.allclose(out, ref, atol=2e-2, rtol=2e-2), (
        float(jnp.max(jnp.abs(out - ref))))

    print("KERNEL_OK")
</pallas_src>

<mosaic_0001>
module attributes {stable_mosaic.version = 11 : i64} {
  func.func @kernel(%arg0: i32, %arg1: memref<1x4x256xf32, #tpu.memory_space<vmem>>, %arg2: memref<4x36xbf16, #tpu.memory_space<vmem>>, %arg3: memref<4x1xf32, #tpu.memory_space<vmem>>, %arg4: memref<4x1xf32, #tpu.memory_space<vmem>>, %arg5: memref<4x36xbf16, #tpu.memory_space<vmem>>, %arg6: memref<4x1xf32, #tpu.memory_space<vmem>>, %arg7: memref<4x1xf32, #tpu.memory_space<vmem>>, %arg8: memref<1x4x256xf32, #tpu.memory_space<vmem>>, %arg9: memref<4x512xf32, #tpu.memory_space<vmem>>) attributes {dimension_semantics = [#tpu.dimension_semantics<parallel>], iteration_bounds = array<i64: 2>, scalar_prefetch = 0 : i64, scratch_operands = 1 : i64, tpu.core_type = #tpu.core_type<tc>, window_params = [{transform_indices = @transform_0, window_bounds = array<i64: 1, 4, 256>}, {pipeline_mode = #tpu.pipeline_mode<synchronous>, transform_indices = @transform_1, window_bounds = array<i64: 4, 36>}, {pipeline_mode = #tpu.pipeline_mode<synchronous>, transform_indices = @transform_2, window_bounds = array<i64: 4, 1>}, {pipeline_mode = #tpu.pipeline_mode<synchronous>, transform_indices = @transform_3, window_bounds = array<i64: 4, 1>}, {pipeline_mode = #tpu.pipeline_mode<synchronous>, transform_indices = @transform_4, window_bounds = array<i64: 4, 36>}, {pipeline_mode = #tpu.pipeline_mode<synchronous>, transform_indices = @transform_5, window_bounds = array<i64: 4, 1>}, {pipeline_mode = #tpu.pipeline_mode<synchronous>, transform_indices = @transform_6, window_bounds = array<i64: 4, 1>}, {transform_indices = @transform_7, window_bounds = array<i64: 1, 4, 256>}]} {
    %cst = arith.constant 0.000000e+00 : f32
    %0 = vector.broadcast %cst : f32 to vector<4x128xf32>
    %c0 = arith.constant 0 : index
    %c0_0 = arith.constant 0 : index
    %1 = vector.load %arg9[%c0, %c0_0] : memref<4x512xf32, #tpu.memory_space<vmem>>, vector<4x128xf32>
    tpu.vector_store %arg9[%c0, %c0_0], %0 {strides = array<i32>} : memref<4x512xf32, #tpu.memory_space<vmem>>, vector<4x128xf32>,
    %cst_1 = arith.constant 0.000000e+00 : f32
    %2 = vector.broadcast %cst_1 : f32 to vector<4x128xf32>
    %c0_2 = arith.constant 0 : index
    %c384 = arith.constant 384 : index
    %3 = vector.load %arg9[%c0_2, %c384] : memref<4x512xf32, #tpu.memory_space<vmem>>, vector<4x128xf32>
    tpu.vector_store %arg9[%c0_2, %c384], %2 {strides = array<i32>} : memref<4x512xf32, #tpu.memory_space<vmem>>, vector<4x128xf32>,
    %4 = tpu.iota {dimensions = array<i32: 1>} : vector<1x256xi32>
    %c16_i32 = arith.constant 16 : i32
    %c0_i32 = arith.constant 0 : i32
    %5 = arith.cmpi eq, %c16_i32, %c0_i32 : i32
    %c1_i32 = arith.constant 1 : i32
    %6 = arith.select %5, %c1_i32, %c16_i32 : i32
    %7 = vector.broadcast %6 : i32 to vector<1x256xi32>
    %8 = arith.remsi %4, %7 : vector<1x256xi32>
    %c0_i32_3 = arith.constant 0 : i32
    %9 = vector.broadcast %c0_i32_3 : i32 to vector<1x256xi32>
    %10 = arith.cmpi ne, %8, %9 : vector<1x256xi32>
    %c0_i32_4 = arith.constant 0 : i32
    %11 = vector.broadcast %c0_i32_4 : i32 to vector<1x256xi32>
    %12 = arith.cmpi slt, %8, %11 : vector<1x256xi32>
    %c0_i32_5 = arith.constant 0 : i32
    %13 = arith.cmpi slt, %6, %c0_i32_5 : i32
    %14 = vector.broadcast %13 : i1 to vector<1x256xi1>
    %15 = vector.broadcast %14 : vector<1x256xi1> to vector<1x256xi1>
    %16 = arith.xori %12, %15 : vector<1x256xi1>
    %17 = arith.andi %16, %10 : vector<1x256xi1>
    %18 = vector.broadcast %6 : i32 to vector<1x256xi32>
    %19 = arith.addi %8, %18 : vector<1x256xi32>
    %20 = arith.select %17, %19, %8 : vector<1x256xi1>, vector<1x256xi32>
    %c0_i32_6 = arith.constant 0 : i32
    %21 = vector.broadcast %c0_i32_6 : i32 to vector<1x256xi32>
    %22 = arith.cmpi ne, %20, %21 : vector<1x256xi32>
    %c15_i32 = arith.constant 15 : i32
    %23 = vector.broadcast %c15_i32 : i32 to vector<1x256xi32>
    %24 = arith.cmpi ne, %20, %23 : vector<1x256xi32>
    %c0_7 = arith.constant 0 : index
    %c0_8 = arith.constant 0 : index
    %c0_9 = arith.constant 0 : index
    %25 = vector.load %arg1[%c0_7, %c0_8, %c0_9] : memref<1x4x256xf32, #tpu.memory_space<vmem>>, vector<1x4x256xf32>
    %26 = vector.shape_cast %25 : vector<1x4x256xf32> to vector<4x256xf32>
    %c0_10 = arith.constant 0 : index
    %c128 = arith.constant 128 : index
    %27 = vector.load %arg9[%c0_10, %c128] : memref<4x512xf32, #tpu.memory_space<vmem>>, vector<4x256xf32>
    tpu.vector_store %arg9[%c0_10, %c128], %26 {strides = array<i32>} : memref<4x512xf32, #tpu.memory_space<vmem>>, vector<4x256xf32>,
    %c0_11 = arith.constant 0 : index
    %c111 = arith.constant 111 : index
    %28 = vector.load %arg9[%c0_11, %c111] : memref<4x512xf32, #tpu.memory_space<vmem>>, vector<4x256xf32>
    %cst_12 = arith.constant 0.000000e+00 : f32
    %29 = vector.shape_cast %22 : vector<1x256xi1> to vector<1x256xi1>
    %30 = vector.broadcast %29 : vector<1x256xi1> to vector<4x256xi1>
    %31 = vector.broadcast %cst_12 : f32 to vector<4x256xf32>
    %32 = arith.select %30, %28, %31 : vector<4x256xi1>, vector<4x256xf32>
    %c0_13 = arith.constant 0 : index
    %c112 = arith.constant 112 : index
    %33 = vector.load %arg9[%c0_13, %c112] : memref<4x512xf32, #tpu.memory_space<vmem>>, vector<4x256xf32>
    %c0_14 = arith.constant 0 : index
    %c113 = arith.constant 113 : index
    %34 = vector.load %arg9[%c0_14, %c113] : memref<4x512xf32, #tpu.memory_space<vmem>>, vector<4x256xf32>
    %cst_15 = arith.constant 0.000000e+00 : f32
    %35 = vector.shape_cast %24 : vector<1x256xi1> to vector<1x256xi1>
    %36 = vector.broadcast %35 : vector<1x256xi1> to vector<4x256xi1>
    %37 = vector.broadcast %cst_15 : f32 to vector<4x256xf32>
    %38 = arith.select %36, %34, %37 : vector<4x256xi1>, vector<4x256xf32>
    %c0_16 = arith.constant 0 : index
    %c127 = arith.constant 127 : index
    %39 = vector.load %arg9[%c0_16, %c127] : memref<4x512xf32, #tpu.memory_space<vmem>>, vector<4x256xf32>
    %cst_17 = arith.constant 0.000000e+00 : f32
    %40 = vector.shape_cast %22 : vector<1x256xi1> to vector<1x256xi1>
    %41 = vector.broadcast %40 : vector<1x256xi1> to vector<4x256xi1>
    %42 = vector.broadcast %cst_17 : f32 to vector<4x256xf32>
    %43 = arith.select %41, %39, %42 : vector<4x256xi1>, vector<4x256xf32>
    %c0_18 = arith.constant 0 : index
    %c128_19 = arith.constant 128 : index
    %44 = vector.load %arg9[%c0_18, %c128_19] : memref<4x512xf32, #tpu.memory_space<vmem>>, vector<4x256xf32>
    %c0_20 = arith.constant 0 : index
    %c129 = arith.constant 129 : index
    %45 = vector.load %arg9[%c0_20, %c129] : memref<4x512xf32, #tpu.memory_space<vmem>>, vector<4x256xf32>
    %cst_21 = arith.constant 0.000000e+00 : f32
    %46 = vector.shape_cast %24 : vector<1x256xi1> to vector<1x256xi1>
    %47 = vector.broadcast %46 : vector<1x256xi1> to vector<4x256xi1>
    %48 = vector.broadcast %cst_21 : f32 to vector<4x256xf32>
    %49 = arith.select %47, %45, %48 : vector<4x256xi1>, vector<4x256xf32>
    %c0_22 = arith.constant 0 : index
    %c143 = arith.constant 143 : index
    %50 = vector.load %arg9[%c0_22, %c143] : memref<4x512xf32, #tpu.memory_space<vmem>>, vector<4x256xf32>
    %cst_23 = arith.constant 0.000000e+00 : f32
    %51 = vector.shape_cast %22 : vector<1x256xi1> to vector<1x256xi1>
    %52 = vector.broadcast %51 : vector<1x256xi1> to vector<4x256xi1>
    %53 = vector.broadcast %cst_23 : f32 to vector<4x256xf32>
    %54 = arith.select %52, %50, %53 : vector<4x256xi1>, vector<4x256xf32>
    %c0_24 = arith.constant 0 : index
    %c144 = arith.constant 144 : index
    %55 = vector.load %arg9[%c0_24, %c144] : memref<4x512xf32, #tpu.memory_space<vmem>>, vector<4x256xf32>
    %c0_25 = arith.constant 0 : index
    %c145 = arith.constant 145 : index
    %56 = vector.load %arg9[%c0_25, %c145] : memref<4x512xf32, #tpu.memory_space<vmem>>, vector<4x256xf32>
    %cst_26 = arith.constant 0.000000e+00 : f32
    %57 = vector.shape_cast %24 : vector<1x256xi1> to vector<1x256xi1>
    %58 = vector.broadcast %57 : vector<1x256xi1> to vector<4x256xi1>
    %59 = vector.broadcast %cst_26 : f32 to vector<4x256xf32>
    %60 = arith.select %58, %56, %59 : vector<4x256xi1>, vector<4x256xf32>
    %61 = tpu.concatenate %32, %33, %38, %43, %44, %49, %54, %55, %60 in 0 : vector<4x256xf32>, vector<4x256xf32>, vector<4x256xf32>, vector<4x256xf32>, vector<4x256xf32>, vector<4x256xf32>, vector<4x256xf32>, vector<4x256xf32>, vector<4x256xf32> -> vector<36x256xf32>
    %62 = arith.truncf %61 : vector<36x256xf32> to vector<36x256xbf16>
    %c0_27 = arith.constant 0 : index
    %c0_28 = arith.constant 0 : index
    %63 = vector.load %arg2[%c0_27, %c0_28] : memref<4x36xbf16, #tpu.memory_space<vmem>>, vector<4x36xbf16>
    %cst_29 = arith.constant dense<0.000000e+00> : vector<4x256xf32>
    %64 = tpu.matmul %63, %62, %cst_29 {dimension_numbers = #tpu.dot_dimension_numbers<[1], [0], [0], [1], [0, 0, 1, 1], [], []>} : vector<4x36xbf16>, vector<36x256xbf16>, vector<4x256xf32> -> vector<4x256xf32>
    %c0_30 = arith.constant 0 : index
    %c0_31 = arith.constant 0 : index
    %65 = vector.load %arg3[%c0_30, %c0_31] : memref<4x1xf32, #tpu.memory_space<vmem>>, vector<4x1xf32>
    %66 = vector.broadcast %65 : vector<4x1xf32> to vector<4x256xf32>
    %67 = arith.mulf %64, %66 : vector<4x256xf32>
    %c0_32 = arith.constant 0 : index
    %c0_33 = arith.constant 0 : index
    %68 = vector.load %arg4[%c0_32, %c0_33] : memref<4x1xf32, #tpu.memory_space<vmem>>, vector<4x1xf32>
    %69 = vector.broadcast %68 : vector<4x1xf32> to vector<4x256xf32>
    %70 = arith.addf %67, %69 : vector<4x256xf32>
    %cst_34 = arith.constant 0.000000e+00 : f32
    %71 = vector.broadcast %cst_34 : f32 to vector<4x256xf32>
    %72 = arith.maximumf %70, %71 : vector<4x256xf32>
    %c0_35 = arith.constant 0 : index
    %c128_36 = arith.constant 128 : index
    %73 = vector.load %arg9[%c0_35, %c128_36] : memref<4x512xf32, #tpu.memory_space<vmem>>, vector<4x256xf32>
    tpu.vector_store %arg9[%c0_35, %c128_36], %72 {strides = array<i32>} : memref<4x512xf32, #tpu.memory_space<vmem>>, vector<4x256xf32>,
    %c0_37 = arith.constant 0 : index
    %c111_38 = arith.constant 111 : index
    %74 = vector.load %arg9[%c0_37, %c111_38] : memref<4x512xf32, #tpu.memory_space<vmem>>, vector<4x256xf32>
    %cst_39 = arith.constant 0.000000e+00 : f32
    %75 = vector.shape_cast %22 : vector<1x256xi1> to vector<1x256xi1>
    %76 = vector.broadcast %75 : vector<1x256xi1> to vector<4x256xi1>
    %77 = vector.broadcast %cst_39 : f32 to vector<4x256xf32>
    %78 = arith.select %76, %74, %77 : vector<4x256xi1>, vector<4x256xf32>
    %c0_40 = arith.constant 0 : index
    %c112_41 = arith.constant 112 : index
    %79 = vector.load %arg9[%c0_40, %c112_41] : memref<4x512xf32, #tpu.memory_space<vmem>>, vector<4x256xf32>
    %c0_42 = arith.constant 0 : index
    %c113_43 = arith.constant 113 : index
    %80 = vector.load %arg9[%c0_42, %c113_43] : memref<4x512xf32, #tpu.memory_space<vmem>>, vector<4x256xf32>
    %cst_44 = arith.constant 0.000000e+00 : f32
    %81 = vector.shape_cast %24 : vector<1x256xi1> to vector<1x256xi1>
    %82 = vector.broadcast %81 : vector<1x256xi1> to vector<4x256xi1>
    %83 = vector.broadcast %cst_44 : f32 to vector<4x256xf32>
    %84 = arith.select %82, %80, %83 : vector<4x256xi1>, vector<4x256xf32>
    %c0_45 = arith.constant 0 : index
    %c127_46 = arith.constant 127 : index
    %85 = vector.load %arg9[%c0_45, %c127_46] : memref<4x512xf32, #tpu.memory_space<vmem>>, vector<4x256xf32>
    %cst_47 = arith.constant 0.000000e+00 : f32
    %86 = vector.shape_cast %22 : vector<1x256xi1> to vector<1x256xi1>
    %87 = vector.broadcast %86 : vector<1x256xi1> to vector<4x256xi1>
    %88 = vector.broadcast %cst_47 : f32 to vector<4x256xf32>
    %89 = arith.select %87, %85, %88 : vector<4x256xi1>, vector<4x256xf32>
    %c0_48 = arith.constant 0 : index
    %c128_49 = arith.constant 128 : index
    %90 = vector.load %arg9[%c0_48, %c128_49] : memref<4x512xf32, #tpu.memory_space<vmem>>, vector<4x256xf32>
    %c0_50 = arith.constant 0 : index
    %c129_51 = arith.constant 129 : index
    %91 = vector.load %arg9[%c0_50, %c129_51] : memref<4x512xf32, #tpu.memory_space<vmem>>, vector<4x256xf32>
    %cst_52 = arith.constant 0.000000e+00 : f32
    %92 = vector.shape_cast %24 : vector<1x256xi1> to vector<1x256xi1>
    %93 = vector.broadcast %92 : vector<1x256xi1> to vector<4x256xi1>
    %94 = vector.broadcast %cst_52 : f32 to vector<4x256xf32>
    %95 = arith.select %93, %91, %94 : vector<4x256xi1>, vector<4x256xf32>
    %c0_53 = arith.constant 0 : index
    %c143_54 = arith.constant 143 : index
    %96 = vector.load %arg9[%c0_53, %c143_54] : memref<4x512xf32, #tpu.memory_space<vmem>>, vector<4x256xf32>
    %cst_55 = arith.constant 0.000000e+00 : f32
    %97 = vector.shape_cast %22 : vector<1x256xi1> to vector<1x256xi1>
    %98 = vector.broadcast %97 : vector<1x256xi1> to vector<4x256xi1>
    %99 = vector.broadcast %cst_55 : f32 to vector<4x256xf32>
    %100 = arith.select %98, %96, %99 : vector<4x256xi1>, vector<4x256xf32>
    %c0_56 = arith.constant 0 : index
    %c144_57 = arith.constant 144 : index
    %101 = vector.load %arg9[%c0_56, %c144_57] : memref<4x512xf32, #tpu.memory_space<vmem>>, vector<4x256xf32>
    %c0_58 = arith.constant 0 : index
    %c145_59 = arith.constant 145 : index
    %102 = vector.load %arg9[%c0_58, %c145_59] : memref<4x512xf32, #tpu.memory_space<vmem>>, vector<4x256xf32>
    %cst_60 = arith.constant 0.000000e+00 : f32
    %103 = vector.shape_cast %24 : vector<1x256xi1> to vector<1x256xi1>
    %104 = vector.broadcast %103 : vector<1x256xi1> to vector<4x256xi1>
    %105 = vector.broadcast %cst_60 : f32 to vector<4x256xf32>
    %106 = arith.select %104, %102, %105 : vector<4x256xi1>, vector<4x256xf32>
    %107 = tpu.concatenate %78, %79, %84, %89, %90, %95, %100, %101, %106 in 0 : vector<4x256xf32>, vector<4x256xf32>, vector<4x256xf32>, vector<4x256xf32>, vector<4x256xf32>, vector<4x256xf32>, vector<4x256xf32>, vector<4x256xf32>, vector<4x256xf32> -> vector<36x256xf32>
    %108 = arith.truncf %107 : vector<36x256xf32> to vector<36x256xbf16>
    %c0_61 = arith.constant 0 : index
    %c0_62 = arith.constant 0 : index
    %109 = vector.load %arg5[%c0_61, %c0_62] : memref<4x36xbf16, #tpu.memory_space<vmem>>, vector<4x36xbf16>
    %cst_63 = arith.constant dense<0.000000e+00> : vector<4x256xf32>
    %110 = tpu.matmul %109, %108, %cst_63 {dimension_numbers = #tpu.dot_dimension_numbers<[1], [0], [0], [1], [0, 0, 1, 1], [], []>} : vector<4x36xbf16>, vector<36x256xbf16>, vector<4x256xf32> -> vector<4x256xf32>
    %c0_64 = arith.constant 0 : index
    %c0_65 = arith.constant 0 : index
    %111 = vector.load %arg6[%c0_64, %c0_65] : memref<4x1xf32, #tpu.memory_space<vmem>>, vector<4x1xf32>
    %112 = vector.broadcast %111 : vector<4x1xf32> to vector<4x256xf32>
    %113 = arith.mulf %110, %112 : vector<4x256xf32>
    %c0_66 = arith.constant 0 : index
    %c0_67 = arith.constant 0 : index
    %114 = vector.load %arg7[%c0_66, %c0_67] : memref<4x1xf32, #tpu.memory_space<vmem>>, vector<4x1xf32>
    %115 = vector.broadcast %114 : vector<4x1xf32> to vector<4x256xf32>
    %116 = arith.addf %113, %115 : vector<4x256xf32>
    %c0_68 = arith.constant 0 : index
    %c0_69 = arith.constant 0 : index
    %c0_70 = arith.constant 0 : index
    %117 = vector.load %arg1[%c0_68, %c0_69, %c0_70] : memref<1x4x256xf32, #tpu.memory_space<vmem>>, vector<1x4x256xf32>
    %118 = vector.shape_cast %117 : vector<1x4x256xf32> to vector<4x256xf32>
    %119 = arith.addf %116, %118 : vector<4x256xf32>
    %cst_71 = arith.constant 0.000000e+00 : f32
    %120 = vector.broadcast %cst_71 : f32 to vector<4x256xf32>
    %121 = arith.maximumf %119, %120 : vector<4x256xf32>
    %c0_72 = arith.constant 0 : index
    %c0_73 = arith.constant 0 : index
    %c0_74 = arith.constant 0 : index
    %122 = vector.load %arg8[%c0_72, %c0_73, %c0_74] : memref<1x4x256xf32, #tpu.memory_space<vmem>>, vector<1x4x256xf32>
    %123 = vector.shape_cast %122 : vector<1x4x256xf32> to vector<4x256xf32>
    %124 = vector.shape_cast %121 : vector<4x256xf32> to vector<1x4x256xf32>
    tpu.vector_store %arg8[%c0_72, %c0_73, %c0_74], %124 {strides = array<i32>} : memref<1x4x256xf32, #tpu.memory_space<vmem>>, vector<1x4x256xf32>,
    return
  }
  func.func @transform_0(%arg0: i32) -> (i32, i32, i32) {
    %c0_i32 = arith.constant 0 : i32
    %c0_i32_0 = arith.constant 0 : i32
    %c0_i32_1 = arith.constant 0 : i32
    return %arg0, %c0_i32, %c0_i32_0 : i32, i32, i32
  }
  func.func @transform_1(%arg0: i32) -> (i32, i32) {
    %c0_i32 = arith.constant 0 : i32
    %c0_i32_0 = arith.constant 0 : i32
    %c0_i32_1 = arith.constant 0 : i32
    return %c0_i32, %c0_i32_0 : i32, i32
  }
  func.func @transform_2(%arg0: i32) -> (i32, i32) {
    %c0_i32 = arith.constant 0 : i32
    %c0_i32_0 = arith.constant 0 : i32
    %c0_i32_1 = arith.constant 0 : i32
    return %c0_i32, %c0_i32_0 : i32, i32
  }
  func.func @transform_3(%arg0: i32) -> (i32, i32) {
    %c0_i32 = arith.constant 0 : i32
    %c0_i32_0 = arith.constant 0 : i32
    %c0_i32_1 = arith.constant 0 : i32
    return %c0_i32, %c0_i32_0 : i32, i32
  }
  func.func @transform_4(%arg0: i32) -> (i32, i32) {
    %c0_i32 = arith.constant 0 : i32
    %c0_i32_0 = arith.constant 0 : i32
    %c0_i32_1 = arith.constant 0 : i32
    return %c0_i32, %c0_i32_0 : i32, i32
  }
  func.func @transform_5(%arg0: i32) -> (i32, i32) {
    %c0_i32 = arith.constant 0 : i32
    %c0_i32_0 = arith.constant 0 : i32
    %c0_i32_1 = arith.constant 0 : i32
    return %c0_i32, %c0_i32_0 : i32, i32
  }
  func.func @transform_6(%arg0: i32) -> (i32, i32) {
    %c0_i32 = arith.constant 0 : i32
    %c0_i32_0 = arith.constant 0 : i32
    %c0_i32_1 = arith.constant 0 : i32
    return %c0_i32, %c0_i32_0 : i32, i32
  }
  func.func @transform_7(%arg0: i32) -> (i32, i32, i32) {
    %c0_i32 = arith.constant 0 : i32
    %c0_i32_0 = arith.constant 0 : i32
    %c0_i32_1 = arith.constant 0 : i32
    return %arg0, %c0_i32, %c0_i32_0 : i32, i32, i32
  }
}

</mosaic_0001>

<llo_original>
// kernel: tpu_custom_call.1
$region0: #{tpu_custom_call.1}
  #allocation0 [shape = 'u32[]', space=smem, size = 0x4, offset = 0x4, fixed_abs, tag = 'smem constant byte address 0x4 - core index']
  #allocation1 [shape = 'u32[144,128]{1,0:T(1,128)}', space=vmem, size = 0x12000, scoped, tag = 'internal scratch']
  #allocation2 [shape = 'f32[4,512]{1,0:T(4,128)}', space=vmem, size = 0x2000, scoped, tag = 'scratch operand']
  %s0 = inlined_call_operand.vmem [shape: f32[2,4,256], index: 0, kind: input, shape index: {}]
  %s1 = inlined_call_operand.vmem [shape: bf16[4,36], index: 1, kind: input, shape index: {}]
  %s2 = inlined_call_operand.vmem [shape: f32[4,1], index: 2, kind: input, shape index: {}]
  %s3 = inlined_call_operand.vmem [shape: f32[4,1], index: 3, kind: input, shape index: {}]
  %s4 = inlined_call_operand.vmem [shape: bf16[4,36], index: 4, kind: input, shape index: {}]
  %s5 = inlined_call_operand.vmem [shape: f32[4,1], index: 5, kind: input, shape index: {}]
  %s6 = inlined_call_operand.vmem [shape: f32[4,1], index: 6, kind: input, shape index: {}]
  %s7 = inlined_call_operand.hbm [shape: f32[2,4,256], index: 7, kind: output, shape index: {}]
  %s8 = sld [smem:[#allocation0]]
  $region61: #{tpu_custom_call.1} parent=0
    _
  %s10 = ssub.s32 1, %s8
  %s11 = scalar_select 0, %s10, %s8
  $region1: #{tpu_custom_call.1} parent=0
    #allocation3 [shape = 'u8[8192]{0}', space=vmem, size = 0x2000, scoped, tag = 'output window, operand 0']
    #allocation4 [shape = 's32[2]{0}', space=sflag, size = 0x8, scoped, tag = 'scoped memory for tpu_custom_call.1']
    %12 = vsyncpa [#allocation4], 0
    %s13 = scalar_lea.sflag [#allocation4], 1
    %14 = vsyncpa %s13, 0
    loop: start=0, step=1, limit=4
    $region2: #{tpu_custom_call.1} parent=1 // loop_pre_header
      _
    $region3: #{tpu_custom_call.1} parent=1 // loop_header
      %s16 = sphi 0, %s20
      %p17 = scmp.ge.s32.totalorder %s16, 4
      %s26 = sphi 0, %s28
      %s29 = sphi 0, %s26
      %s30 = sphi 0, %s29
      %s46 = sphi 0, %s30
      %s50 = sphi 0, %s50
      %s52 = sphi 0, %s50
      %s53 = sphi 0, %s52
      %s67 = sphi 0, %s53
      %s71 = sphi 0, %s71
      %s73 = sphi 0, %s71
      %s74 = sphi 0, %s73
      %s88 = sphi 0, %s74
      %s92 = sphi 0, %s92
      %s94 = sphi 0, %s92
      %s95 = sphi 0, %s94
      %s109 = sphi 0, %s95
      %s113 = sphi 0, %s113
      %s115 = sphi 0, %s113
      %s116 = sphi 0, %s115
      %s130 = sphi 0, %s116
      %s134 = sphi 0, %s134
      %s136 = sphi 0, %s134
      %s137 = sphi 0, %s136
      %s151 = sphi 0, %s137
      %s155 = sphi 0, %s155
      %s157 = sphi 0, %s155
      %s158 = sphi 0, %s157
      %s172 = sphi 0, %s158
      %s178 = sphi 0, %s180
      %s181 = sphi 0, %s178
      %s182 = sphi 0, %s181
      %s198 = sphi 0, %s182
    $region4: #{tpu_custom_call.1} parent=1 // loop_header_branch
      %19 = sbr.rel (%p17) target = $region8
    $region5: #{tpu_custom_call.1} parent=1 // loop_body
      %s21 = ssub.s32 %s16, 1
      %s22 = ssub.s32 %s16, 2
      %s23 = sadd.s32 %s16, 1
      %s24 = ssub.s32 %s16, %s23
      %p25 = scmp.eq.s32.totalorder %s24, 0
      %s27 = sadd.s32 %s26, 1
      %s28 = scalar_select %p25, %s26, %s27
      %p31 = pneg %p25
      %p32 = scmp.eq.s32.totalorder %s16, 1
      %p33 = por %p31, %p32
      %p34 = scmp.ne.s32.totalorder %s26, %s29
      %p35 = scmp.eq.s32.totalorder %s16, 0
      %p36 = por %p34, %p35
      %p37 = scmp.ne.s32.totalorder %s26, %s29
      %p38 = scmp.eq.s32.totalorder %s21, 1
      %p39 = por %p37, %p38
      %p40 = scmp.ne.s32.totalorder %s29, %s30
      %p41 = scmp.eq.s32.totalorder %s21, 0
      %p42 = por %p40, %p41
      %p43 = scmp.ne.s32.totalorder %s29, %s30
      %p44 = scmp.eq.s32.totalorder %s22, 1
      %p45 = por %p43, %p44
      %p47 = scmp.ne.s32.totalorder %s30, %s46
      %p48 = scmp.eq.s32.totalorder %s22, 0
      %p49 = por %p47, %p48
      %s51 = sadd.s32 %s50, 1
      %p54 = scmp.eq.s32.totalorder %s16, 1
      %p55 = scmp.ne.s32.totalorder %s50, %s52
      %p56 = scmp.eq.s32.totalorder %s16, 0
      %p57 = por %p55, %p56
      %p58 = scmp.ne.s32.totalorder %s50, %s52
      %p59 = scmp.eq.s32.totalorder %s21, 1
      %p60 = por %p58, %p59
      %p61 = scmp.ne.s32.totalorder %s52, %s53
      %p62 = scmp.eq.s32.totalorder %s21, 0
      %p63 = por %p61, %p62
      %p64 = scmp.ne.s32.totalorder %s52, %s53
      %p65 = scmp.eq.s32.totalorder %s22, 1
      %p66 = por %p64, %p65
      %p68 = scmp.ne.s32.totalorder %s53, %s67
      %p69 = scmp.eq.s32.totalorder %s22, 0
      %p70 = por %p68, %p69
      %s72 = sadd.s32 %s71, 1
      %p75 = scmp.eq.s32.totalorder %s16, 1
      %p76 = scmp.ne.s32.totalorder %s71, %s73
      %p77 = scmp.eq.s32.totalorder %s16, 0
      %p78 = por %p76, %p77
      %p79 = scmp.ne.s32.totalorder %s71, %s73
      %p80 = scmp.eq.s32.totalorder %s21, 1
      %p81 = por %p79, %p80
      %p82 = scmp.ne.s32.totalorder %s73, %s74
      %p83 = scmp.eq.s32.totalorder %s21, 0
      %p84 = por %p82, %p83
      %p85 = scmp.ne.s32.totalorder %s73, %s74
      %p86 = scmp.eq.s32.totalorder %s22, 1
      %p87 = por %p85, %p86
      %p89 = scmp.ne.s32.totalorder %s74, %s88
      %p90 = scmp.eq.s32.totalorder %s22, 0
      %p91 = por %p89, %p90
      %s93 = sadd.s32 %s92, 1
      %p96 = scmp.eq.s32.totalorder %s16, 1
      %p97 = scmp.ne.s32.totalorder %s92, %s94
      %p98 = scmp.eq.s32.totalorder %s16, 0
      %p99 = por %p97, %p98
      %p100 = scmp.ne.s32.totalorder %s92, %s94
      %p101 = scmp.eq.s32.totalorder %s21, 1
      %p102 = por %p100, %p101
      %p103 = scmp.ne.s32.totalorder %s94, %s95
      %p104 = scmp.eq.s32.totalorder %s21, 0
      %p105 = por %p103, %p104
      %p106 = scmp.ne.s32.totalorder %s94, %s95
      %p107 = scmp.eq.s32.totalorder %s22, 1
      %p108 = por %p106, %p107
      %p110 = scmp.ne.s32.totalorder %s95, %s109
      %p111 = scmp.eq.s32.totalorder %s22, 0
      %p112 = por %p110, %p111
      %s114 = sadd.s32 %s113, 1
      %p117 = scmp.eq.s32.totalorder %s16, 1
      %p118 = scmp.ne.s32.totalorder %s113, %s115
      %p119 = scmp.eq.s32.totalorder %s16, 0
      %p120 = por %p118, %p119
      %p121 = scmp.ne.s32.totalorder %s113, %s115
      %p122 = scmp.eq.s32.totalorder %s21, 1
      %p123 = por %p121, %p122
      %p124 = scmp.ne.s32.totalorder %s115, %s116
      %p125 = scmp.eq.s32.totalorder %s21, 0
      %p126 = por %p124, %p125
      %p127 = scmp.ne.s32.totalorder %s115, %s116
      %p128 = scmp.eq.s32.totalorder %s22, 1
      %p129 = por %p127, %p128
      %p131 = scmp.ne.s32.totalorder %s116, %s130
      %p132 = scmp.eq.s32.totalorder %s22, 0
      %p133 = por %p131, %p132
      %s135 = sadd.s32 %s134, 1
      %p138 = scmp.eq.s32.totalorder %s16, 1
      %p139 = scmp.ne.s32.totalorder %s134, %s136
      %p140 = scmp.eq.s32.totalorder %s16, 0
      %p141 = por %p139, %p140
      %p142 = scmp.ne.s32.totalorder %s134, %s136
      %p143 = scmp.eq.s32.totalorder %s21, 1
      %p144 = por %p142, %p143
      %p145 = scmp.ne.s32.totalorder %s136, %s137
      %p146 = scmp.eq.s32.totalorder %s21, 0
      %p147 = por %p145, %p146
      %p148 = scmp.ne.s32.totalorder %s136, %s137
      %p149 = scmp.eq.s32.totalorder %s22, 1
      %p150 = por %p148, %p149
      %p152 = scmp.ne.s32.totalorder %s137, %s151
      %p153 = scmp.eq.s32.totalorder %s22, 0
      %p154 = por %p152, %p153
      %s156 = sadd.s32 %s155, 1
      %p159 = scmp.eq.s32.totalorder %s16, 1
      %p160 = scmp.ne.s32.totalorder %s155, %s157
      %p161 = scmp.eq.s32.totalorder %s16, 0
      %p162 = por %p160, %p161
      %p163 = scmp.ne.s32.totalorder %s155, %s157
      %p164 = scmp.eq.s32.totalorder %s21, 1
      %p165 = por %p163, %p164
      %p166 = scmp.ne.s32.totalorder %s157, %s158
      %p167 = scmp.eq.s32.totalorder %s21, 0
      %p168 = por %p166, %p167
      %p169 = scmp.ne.s32.totalorder %s157, %s158
      %p170 = scmp.eq.s32.totalorder %s22, 1
      %p171 = por %p169, %p170
      %p173 = scmp.ne.s32.totalorder %s158, %s172
      %p174 = scmp.eq.s32.totalorder %s22, 0
      %p175 = por %p173, %p174
      %s176 = ssub.s32 %s16, %s23
      %p177 = scmp.eq.s32.totalorder %s176, 0
      %s179 = sadd.s32 %s178, 1
      %s180 = scalar_select %p177, %s178, %s179
      %p183 = pneg %p177
      %p184 = scmp.eq.s32.totalorder %s16, 1
      %p185 = por %p183, %p184
      %p186 = scmp.ne.s32.totalorder %s178, %s181
      %p187 = scmp.eq.s32.totalorder %s16, 0
      %p188 = por %p186, %p187
      %p189 = scmp.ne.s32.totalorder %s178, %s181
      %p190 = scmp.eq.s32.totalorder %s21, 1
      %p191 = por %p189, %p190
      %p192 = scmp.ne.s32.totalorder %s181, %s182
      %p193 = scmp.eq.s32.totalorder %s21, 0
      %p194 = por %p192, %p193
      %p195 = scmp.ne.s32.totalorder %s181, %s182
      %p196 = scmp.eq.s32.totalorder %s22, 1
      %p197 = por %p195, %p196
      %p199 = scmp.ne.s32.totalorder %s182, %s198
      %p200 = scmp.eq.s32.totalorder %s22, 0
      %p201 = por %p199, %p200
      %p202 = scmp.le.s32.totalorder 1, %s16
      %p203 = scmp.lt.s32.totalorder %s16, 3
      %p204 = pnand %p202, %p203
      %p205 = pneg %p204
      // Predicated region
      $region9: #{tpu_custom_call.1} parent=5 // pred_check
        _
      $region10: #{tpu_custom_call.1} parent=5 // pred_check_branch
        %207 = sbr.rel (%p204) target = $region12
      $region11: #{tpu_custom_call.1} parent=5 // pred_region
        %s208 = ssub.s32 %s16, 1
        // Predicated region
        $region13: #{tpu_custom_call.1} parent=11 // pred_check
          %p209 = pneg %p63
        $region14: #{tpu_custom_call.1} parent=11 // pred_check_branch
          %211 = sbr.rel (%p209) target = $region16
        $region15: #{tpu_custom_call.1} parent=11 // pred_region
          _
        $region16: #{tpu_custom_call.1} parent=11 // pred_fallthru
          _
        // Predicated region
        $region17: #{tpu_custom_call.1} parent=11 // pred_check
          %p212 = pneg %p84
        $region18: #{tpu_custom_call.1} parent=11 // pred_check_branch
          %214 = sbr.rel (%p212) target = $region20
        $region19: #{tpu_custom_call.1} parent=11 // pred_region
          _
        $region20: #{tpu_custom_call.1} parent=11 // pred_fallthru
          _
        // Predicated region
        $region21: #{tpu_custom_call.1} parent=11 // pred_check
          %p215 = pneg %p105
        $region22: #{tpu_custom_call.1} parent=11 // pred_check_branch
          %217 = sbr.rel (%p215) target = $region24
        $region23: #{tpu_custom_call.1} parent=11 // pred_region
          _
        $region24: #{tpu_custom_call.1} parent=11 // pred_fallthru
          _
        // Predicated region
        $region25: #{tpu_custom_call.1} parent=11 // pred_check
          %p218 = pneg %p126
        $region26: #{tpu_custom_call.1} parent=11 // pred_check_branch
          %220 = sbr.rel (%p218) target = $region28
        $region27: #{tpu_custom_call.1} parent=11 // pred_region
          _
        $region28: #{tpu_custom_call.1} parent=11 // pred_fallthru
          _
        // Predicated region
        $region29: #{tpu_custom_call.1} parent=11 // pred_check
          %p221 = pneg %p147
        $region30: #{tpu_custom_call.1} parent=11 // pred_check_branch
          %223 = sbr.rel (%p221) target = $region32
        $region31: #{tpu_custom_call.1} parent=11 // pred_region
          _
        $region32: #{tpu_custom_call.1} parent=11 // pred_fallthru
          _
        // Predicated region
        $region33: #{tpu_custom_call.1} parent=11 // pred_check
          %p224 = pneg %p168
        $region34: #{tpu_custom_call.1} parent=11 // pred_check_branch
          %226 = sbr.rel (%p224) target = $region36
        $region35: #{tpu_custom_call.1} parent=11 // pred_region
          _
        $region36: #{tpu_custom_call.1} parent=11 // pred_fallthru
          _
      $region12: #{tpu_custom_call.1} parent=5 // pred_fallthru
        _
      %p227 = scmp.lt.s32.totalorder %s16, 2
      // Predicated region
      $region37: #{tpu_custom_call.1} parent=5 // pred_check
        %p228 = pneg %p227
      $region38: #{tpu_custom_call.1} parent=5 // pred_check_branch
        %230 = sbr.rel (%p228) target = $region40
      $region39: #{tpu_custom_call.1} parent=5 // pred_region
        // Predicated region
        $region41: #{tpu_custom_call.1} parent=39 // pred_check
          %p231 = pneg %p36
        $region42: #{tpu_custom_call.1} parent=39 // pred_check_branch
          %233 = sbr.rel (%p231) target = $region44
        $region43: #{tpu_custom_call.1} parent=39 // pred_region
          %p234 = scmp.lt.s32.totalorder %s16, 1
          %s235 = scalar_select %p234, %s16, 1
          %s236 = smul.addr %s235, 2
          %s237 = smul.addr %s236, 4
          %s238 = scalar_lea.vmem %s0, %s237
        $region44: #{tpu_custom_call.1} parent=39 // pred_fallthru
          _
      $region40: #{tpu_custom_call.1} parent=5 // pred_fallthru
        _
      %p239 = scmp.le.s32.totalorder 1, %s16
      %p240 = scmp.lt.s32.totalorder %s16, 3
      %p241 = pnand %p239, %p240
      %p242 = pneg %p241
      // Predicated region
      $region45: #{tpu_custom_call.1} parent=5 // pred_check
        _
      $region46: #{tpu_custom_call.1} parent=5 // pred_check_branch
        %244 = sbr.rel (%p241) target = $region48
      $region47: #{tpu_custom_call.1} parent=5 // pred_region
        %s245 = ssub.s32 %s16, 1
        %p246 = scmp.lt.s32.totalorder %s21, 1
        %s247 = scalar_select %p246, %s21, 1
        %s248 = smul.addr %s247, 2
        %s249 = smul.addr %s248, 4
        %s250 = scalar_lea.vmem %s0, %s249
        %p251 = pneg %p42
        %p252 = pneg %p39
        %p253 = pneg %p63
        %p254 = pneg %p60
        %p255 = pneg %p84
        %p256 = pneg %p81
        %p257 = pneg %p105
        %p258 = pneg %p102
        %p259 = pneg %p126
        %p260 = pneg %p123
        %p261 = pneg %p147
        %p262 = pneg %p144
        %p263 = pneg %p168
        %p264 = pneg %p165
        %p265 = pneg %p194
        %p266 = pneg %p191
        %s267 = sand.u32 %s181, 1
        %s268 = scalar_lea.sflag [#allocation4], %s267
        %s269 = sand.u32 %s181, 1
        %s270 = smul.addr %s269, 8
        %s271 = scalar_lea.vmem [#allocation3], %s270
        %p272 = scmp.lt.s32.totalorder %s21, 1
        %s273 = scalar_select %p272, %s21, 1
        %s274 = smul.addr %s273, 2
        %s275 = smul.addr %s274, 4
        %s276 = scalar_lea.vmem %s0, %s275
        %278 = vst [vmem:[#allocation2] sm:$0xf] 0.0
        %279 = vst [vmem:[#allocation2 + $0xc] sm:$0xf] 0.0
        %v280 = vlaneseq
        %v281 = vand.u32 %v280, 127
        %v282 = vadd.s32 %v281, 128
        %vm283 = vcmp.lt.s32.totalorder %v281, 0
        %v284 = vsub.s32 0, %v281
        %v285 = vsel %vm283, %v284, %v281
        %v286 = vshrl.u32 %v285, 4
        %v287 = vand.u32 %v285, 15
        %v288 = vsub.s32 0, %v287
        %v289 = vsel %vm283, %v288, %v287
        %vm290 = vcmp.lt.s32.totalorder %v282, 0
        %v291 = vsub.s32 0, %v282
        %v292 = vsel %vm290, %v291, %v282
        %v293 = vshrl.u32 %v292, 4
        %v294 = vand.u32 %v292, 15
        %v295 = vsub.s32 0, %v294
        %v296 = vsel %vm290, %v295, %v294
        %vm297 = vcmp.ne.s32.totalorder %v289, 0
        %vm298 = vcmp.ne.s32.totalorder %v296, 0
        %vm299 = vcmp.lt.s32.totalorder %v289, 0
        %vm300 = vcmp.lt.s32.totalorder %v296, 0
        %vm301 = vmand %vm299, %vm297
        %vm302 = vmand %vm300, %vm298
        %v303 = vadd.s32 %v289, 16
        %v304 = vadd.s32 %v296, 16
        %v305 = vsel %vm301, %v303, %v289
        %v306 = vsel %vm302, %v304, %v296
        %vm307 = vcmp.ne.s32.totalorder %v305, 0
        %vm308 = vcmp.ne.s32.totalorder %v306, 0
        %vm309 = vcmp.ne.s32.totalorder %v305, 15
        %vm310 = vcmp.ne.s32.totalorder %v306, 15
        %v311 = vld [vmem:[%s276] sm:$0xff]
        %312 = vst [vmem:[#allocation2 + $0x4] sm:$0xff] %v311
        %v313 = vld [vmem:[#allocation2] sm:$0xff]
        %v314 = vld [vmem:[#allocation2 + $0x8] sm:$0xf]
        %v315 = vsel %vm307, 1, 0
        %v316 = vsel %vm308, 1, 0
        %vm317 = vcmp.eq.s32.totalorder %v315, 1
        %vm318 = vcmp.eq.s32.totalorder %v316, 1
        %v321 = vcombine.high %v313, %v313
        %322 = vrot.lane.b32.xlu0 %v313, 17
        %v323 = vpop.permute.xlu0 %322
        %324 = vrot.lane.b32.xlu0 %v321, 17
        %v325 = vpop.permute.xlu0 %324
        %326 = vrot.lane.b32.xlu0 %v314, 17
        %v327 = vpop.permute.xlu0 %326
        %vm328 = vcmask 138240
        %v329 = vsel %vm328, %v323, %v325
        %v330 = vsel %vm328, %v325, %v327
        %v333 = vsel %vm317, %v329, 0.0
        %v334 = vsel %vm318, %v330, 0.0
        %v335 = vsel %vm309, 1, 0
        %v336 = vsel %vm310, 1, 0
        %vm337 = vcmp.eq.s32.totalorder %v335, 1
        %vm338 = vcmp.eq.s32.totalorder %v336, 1
        %339 = vrot.lane.b32.xlu0 %v313, 15
        %v340 = vpop.permute.xlu0 %339
        %341 = vrot.lane.b32.xlu0 %v321, 15
        %v342 = vpop.permute.xlu0 %341
        %343 = vrot.lane.b32.xlu0 %v314, 15
        %v344 = vpop.permute.xlu0 %343
        %vm345 = vcmask 121856
        %v346 = vsel %vm345, %v340, %v342
        %v347 = vsel %vm345, %v342, %v344
        %v350 = vsel %vm337, %v346, 0.0
        %v351 = vsel %vm338, %v347, 0.0
        %352 = vrot.lane.b32.xlu0 %v313, 1
        %v353 = vpop.permute.xlu0 %352
        %354 = vrot.lane.b32.xlu0 %v321, 1
        %v355 = vpop.permute.xlu0 %354
        %356 = vrot.lane.b32.xlu0 %v314, 1
        %v357 = vpop.permute.xlu0 %356
        %vm358 = vcmask 7168
        %v359 = vsel %vm358, %v353, %v355
        %v360 = vsel %vm358, %v355, %v357
        %v363 = vsel %vm317, %v359, 0.0
        %v364 = vsel %vm318, %v360, 0.0
        %v365 = vld [vmem:[#allocation2 + $0x4] sm:$0xff]
        %v366 = vld [vmem:[#allocation2 + $0x4] sm:$0xff]
        %v367 = vld [vmem:[#allocation2 + $0xc] sm:$0xf]
        %v370 = vcombine.high %v366, %v366
        %371 = vrot.lane.b32.xlu0 %v366, 127
        %v372 = vpop.permute.xlu0 %371
        %373 = vrot.lane.b32.xlu0 %v370, 127
        %v374 = vpop.permute.xlu0 %373
        %375 = vrot.lane.b32.xlu0 %v367, 127
        %v376 = vpop.permute.xlu0 %375
        %vm377 = vcmask 1039360
        %v378 = vsel %vm377, %v372, %v374
        %v379 = vsel %vm377, %v374, %v376
        %v382 = vsel %vm337, %v378, 0.0
        %v383 = vsel %vm338, %v379, 0.0
        %384 = vrot.lane.b32.xlu0 %v366, 113
        %v385 = vpop.permute.xlu0 %384
        %386 = vrot.lane.b32.xlu0 %v370, 113
        %v387 = vpop.permute.xlu0 %386
        %388 = vrot.lane.b32.xlu0 %v367, 113
        %v389 = vpop.permute.xlu0 %388
        %vm390 = vcmask 924672
        %v391 = vsel %vm390, %v385, %v387
        %v392 = vsel %vm390, %v387, %v389
        %v395 = vsel %vm317, %v391, 0.0
        %v396 = vsel %vm318, %v392, 0.0
        %397 = vrot.lane.b32.xlu0 %v366, 111
        %v398 = vpop.permute.xlu0 %397
        %399 = vrot.lane.b32.xlu0 %v370, 111
        %v400 = vpop.permute.xlu0 %399
        %401 = vrot.lane.b32.xlu0 %v367, 111
        %v402 = vpop.permute.xlu0 %401
        %vm403 = vcmask 908288
        %v404 = vsel %vm403, %v398, %v400
        %v405 = vsel %vm403, %v400, %v402
        %v408 = vsel %vm337, %v404, 0.0
        %v409 = vsel %vm338, %v405, 0.0
        %v410 = vcombine.low %v313, %v313
        %v411 = vcombine.low %v314, %v314
        %412 = vrot.lane.b32.xlu0 %v410, 16
        %v413 = vpop.permute.xlu0 %412
        %414 = vrot.lane.b32.xlu0 %v313, 16
        %v415 = vpop.permute.xlu0 %414
        %416 = vrot.lane.b32.xlu0 %v411, 16
        %v417 = vpop.permute.xlu0 %416
        %vm418 = vcmask 130048
        %v419 = vsel %vm418, %v413, %v415
        %v420 = vsel %vm418, %v415, %v417
        %v425 = vrot.slane %v363, 4
        %v426 = vrot.slane %v364, 4
        %v430 = vcombine.high %v365, %v365
        %v434 = vrot.slane %v382, 4
        %v435 = vrot.slane %v383, 4
        %v438 = vcombine.low %v366, %v366
        %v439 = vcombine.low %v367, %v367
        %440 = vrot.lane.b32.xlu0 %v438, 112
        %v441 = vpop.permute.xlu0 %440
        %442 = vrot.lane.b32.xlu0 %v366, 112
        %v443 = vpop.permute.xlu0 %442
        %444 = vrot.lane.b32.xlu0 %v439, 112
        %v445 = vpop.permute.xlu0 %444
        %vm446 = vcmask 916480
        %v447 = vsel %vm446, %v441, %v443
        %v448 = vsel %vm446, %v443, %v445
        %vm451 = vcmask 1043456
        %v452 = vsel %vm451, %v333, %v419
        %v453 = vsel %vm451, %v334, %v420
        %v454 = vsel %vm451, %v350, %v425
        %v455 = vsel %vm451, %v351, %v426
        %v456 = vsel %vm451, %v365, %v434
        %v457 = vsel %vm451, %v430, %v435
        %v458 = vsel %vm451, %v395, %v447
        %v459 = vsel %vm451, %v396, %v448
        %v460 = vpack.c.bf16 %v454, %v452
        %v461 = vpack.c.bf16 %v455, %v453
        %v462 = vpack.c.bf16 %v458, %v456
        %v463 = vpack.c.bf16 %v459, %v457
        %v464 = vpack.c.bf16 %v408, %v408
        %v465 = vpack.c.bf16 %v409, %v409
        %v466 = vld [vmem:[%s1] sm:$0x3]
        %vm467 = vcmask 293888
        %v469 = vsel %vm467, %v466, 0
        %vm471 = vcmask 1041408
        %v473 = vsel %vm471, %v464, 0
        %v476 = vsel %vm471, %v465, 0
        %478 = vmatprep.subr.bf16.mxu0 0
        %479 = vmatpush1.bf16.msra.mxu0 0
        %480 = vmatprep.subr.bf16.mxu0 0
        %481 = vmatpush1.bf16.msra.mxu0 0
        %482 = vmatprep.subr.bf16.mxu0 0
        %483 = vmatpush1.bf16.msra.mxu0 0
        %484 = vmatprep.subr.bf16.mxu0 0
        %485 = vmatpush1.bf16.msra.mxu0 0
        %486 = vmatprep.subr.bf16.mxu0 0
        %487 = vmatpush1.bf16.msra.mxu0 0
        %488 = vmatprep.subr.bf16.mxu0 %v476
        %489 = vmatpush1.bf16.msra.mxu0 %v473
        %490 = vmatprep.subr.bf16.mxu0 %v463
        %491 = vmatpush1.bf16.msra.mxu0 %v462
        %492 = vmatprep.subr.bf16.mxu0 %v461
        %493 = vmatpush1.bf16.msra.mxu0 %v460
        %494 = vmatprep.subr.bf16.mxu0 0
        %495 = vmatpush2.bf16.msra.mxu0 0
        %496 = vmatprep.subr.bf16.mxu0 0
        %497 = vmatpush2.bf16.msra.mxu0 0
        %498 = vmatprep.subr.bf16.mxu0 0
        %499 = vmatpush2.bf16.msra.mxu0 0
        %500 = vmatprep.subr.bf16.mxu0 0
        %501 = vmatpush2.bf16.msra.mxu0 0
        %502 = vmatprep.subr.bf16.mxu0 0
        %503 = vmatpush2.bf16.msra.mxu0 0
        %504 = vmatprep.subr.bf16.mxu0 0
        %505 = vmatpush2.bf16.msra.mxu0 0
        %506 = vmatprep.subr.bf16.mxu0 0
        %507 = vmatpush2.bf16.msra.mxu0 0
        %508 = vmatprep.subr.bf16.mxu0 0
        %509 = vmatpush2.bf16.msra.mxu0 0
        %510 = vmatprep.mubr.bf16.mxu0 0
        %511 = vmatmul.mubr.bf16.gmra.mxu0 %v469
        %v512 = vpop.f32.mrf.mxu0
        %v513 = vadd.f32 0.0, %v512
        %v514 = vpop.f32.mrf.mxu0
        %v515 = vadd.f32 0.0, %v514
        %v516 = vpop.f32.mrf.mxu0
        %v517 = vpop.f32.mrf.mxu0
        %518 = vdwg.mxu0
        %v519 = vld [vmem:[%s2] sm:$0xf]
        %521 = vset.pattern.permute.xlu0 0
        %522 = vperm.xlu0 %521, %v519
        %v523 = vpop.permute.xlu0 %522
        %v525 = vmul.f32 %v513, %v523
        %v526 = vmul.f32 %v515, %v523
        %v527 = vld [vmem:[%s3] sm:$0xf]
        %529 = vset.pattern.permute.xlu0 0
        %530 = vperm.xlu0 %529, %v527
        %v531 = vpop.permute.xlu0 %530
        %v533 = vadd.f32 %v525, %v531
        %v534 = vadd.f32 %v526, %v531
        %v535 = vmax.f32 %v533, 0.0
        %v536 = vmax.f32 %v534, 0.0
        %v539 = vcombine.low %v535, %v536
        %541 = vst [vmem:[#allocation2 + $0x4] sm:$0xff] %v539
        %v542 = vld [vmem:[#allocation2] sm:$0xff]
        %v543 = vld [vmem:[#allocation2 + $0x8] sm:$0xf]
        %v546 = vcombine.high %v542, %v542
        %547 = vrot.lane.b32.xlu0 %v542, 17
        %v548 = vpop.permute.xlu0 %547
        %549 = vrot.lane.b32.xlu0 %v546, 17
        %v550 = vpop.permute.xlu0 %549
        %551 = vrot.lane.b32.xlu0 %v543, 17
        %v552 = vpop.permute.xlu0 %551
        %v553 = vsel %vm328, %v548, %v550
        %v554 = vsel %vm328, %v550, %v552
        %v557 = vsel %vm317, %v553, 0.0
        %v558 = vsel %vm318, %v554, 0.0
        %559 = vrot.lane.b32.xlu0 %v542, 15
        %v560 = vpop.permute.xlu0 %559
        %561 = vrot.lane.b32.xlu0 %v546, 15
        %v562 = vpop.permute.xlu0 %561
        %563 = vrot.lane.b32.xlu0 %v543, 15
        %v564 = vpop.permute.xlu0 %563
        %v565 = vsel %vm345, %v560, %v562
        %v566 = vsel %vm345, %v562, %v564
        %v569 = vsel %vm337, %v565, 0.0
        %v570 = vsel %vm338, %v566, 0.0
        %571 = vrot.lane.b32.xlu0 %v542, 1
        %v572 = vpop.permute.xlu0 %571
        %573 = vrot.lane.b32.xlu0 %v546, 1
        %v574 = vpop.permute.xlu0 %573
        %575 = vrot.lane.b32.xlu0 %v543, 1
        %v576 = vpop.permute.xlu0 %575
        %v577 = vsel %vm358, %v572, %v574
        %v578 = vsel %vm358, %v574, %v576
        %v581 = vsel %vm317, %v577, 0.0
        %v582 = vsel %vm318, %v578, 0.0
        %v583 = vld [vmem:[#allocation2 + $0x4] sm:$0xff]
        %v584 = vld [vmem:[#allocation2 + $0x4] sm:$0xff]
        %v585 = vld [vmem:[#allocation2 + $0xc] sm:$0xf]
        %v588 = vcombine.high %v584, %v584
        %589 = vrot.lane.b32.xlu0 %v584, 127
        %v590 = vpop.permute.xlu0 %589
        %591 = vrot.lane.b32.xlu0 %v588, 127
        %v592 = vpop.permute.xlu0 %591
        %593 = vrot.lane.b32.xlu0 %v585, 127
        %v594 = vpop.permute.xlu0 %593
        %v595 = vsel %vm377, %v590, %v592
        %v596 = vsel %vm377, %v592, %v594
        %v599 = vsel %vm337, %v595, 0.0
        %v600 = vsel %vm338, %v596, 0.0
        %601 = vrot.lane.b32.xlu0 %v584, 113
        %v602 = vpop.permute.xlu0 %601
        %603 = vrot.lane.b32.xlu0 %v588, 113
        %v604 = vpop.permute.xlu0 %603
        %605 = vrot.lane.b32.xlu0 %v585, 113
        %v606 = vpop.permute.xlu0 %605
        %v607 = vsel %vm390, %v602, %v604
        %v608 = vsel %vm390, %v604, %v606
        %v611 = vsel %vm317, %v607, 0.0
        %v612 = vsel %vm318, %v608, 0.0
        %613 = vrot.lane.b32.xlu0 %v584, 111
        %v614 = vpop.permute.xlu0 %613
        %615 = vrot.lane.b32.xlu0 %v588, 111
        %v616 = vpop.permute.xlu0 %615
        %617 = vrot.lane.b32.xlu0 %v585, 111
        %v618 = vpop.permute.xlu0 %617
        %v619 = vsel %vm403, %v614, %v616
        %v620 = vsel %vm403, %v616, %v618
        %v623 = vsel %vm337, %v619, 0.0
        %v624 = vsel %vm338, %v620, 0.0
        %v625 = vcombine.low %v542, %v542
        %v626 = vcombine.low %v543, %v543
        %627 = vrot.lane.b32.xlu0 %v625, 16
        %v628 = vpop.permute.xlu0 %627
        %629 = vrot.lane.b32.xlu0 %v542, 16
        %v630 = vpop.permute.xlu0 %629
        %631 = vrot.lane.b32.xlu0 %v626, 16
        %v632 = vpop.permute.xlu0 %631
        %v633 = vsel %vm418, %v628, %v630
        %v634 = vsel %vm418, %v630, %v632
        %v639 = vrot.slane %v581, 4
        %v640 = vrot.slane %v582, 4
        %v644 = vcombine.high %v583, %v583
        %v648 = vrot.slane %v599, 4
        %v649 = vrot.slane %v600, 4
        %v652 = vcombine.low %v584, %v584
        %v653 = vcombine.low %v585, %v585
        %654 = vrot.lane.b32.xlu0 %v652, 112
        %v655 = vpop.permute.xlu0 %654
        %656 = vrot.lane.b32.xlu0 %v584, 112
        %v657 = vpop.permute.xlu0 %656
        %658 = vrot.lane.b32.xlu0 %v653, 112
        %v659 = vpop.permute.xlu0 %658
        %v660 = vsel %vm446, %v655, %v657
        %v661 = vsel %vm446, %v657, %v659
        %v664 = vsel %vm451, %v557, %v633
        %v665 = vsel %vm451, %v558, %v634
        %v666 = vsel %vm451, %v569, %v639
        %v667 = vsel %vm451, %v570, %v640
        %v668 = vsel %vm451, %v583, %v648
        %v669 = vsel %vm451, %v644, %v649
        %v670 = vsel %vm451, %v611, %v660
        %v671 = vsel %vm451, %v612, %v661
        %v672 = vpack.c.bf16 %v666, %v664
        %v673 = vpack.c.bf16 %v667, %v665
        %v674 = vpack.c.bf16 %v670, %v668
        %v675 = vpack.c.bf16 %v671, %v669
        %v676 = vpack.c.bf16 %v623, %v623
        %v677 = vpack.c.bf16 %v624, %v624
        %v678 = vld [vmem:[%s4] sm:$0x3]
        %v680 = vsel %vm467, %v678, 0
        %v683 = vsel %vm471, %v676, 0
        %v686 = vsel %vm471, %v677, 0
        %688 = vmatprep.subr.bf16.mxu0 0
        %689 = vmatpush1.bf16.msra.mxu0 0
        %690 = vmatprep.subr.bf16.mxu0 0
        %691 = vmatpush1.bf16.msra.mxu0 0
        %692 = vmatprep.subr.bf16.mxu0 0
        %693 = vmatpush1.bf16.msra.mxu0 0
        %694 = vmatprep.subr.bf16.mxu0 0
        %695 = vmatpush1.bf16.msra.mxu0 0
        %696 = vmatprep.subr.bf16.mxu0 0
        %697 = vmatpush1.bf16.msra.mxu0 0
        %698 = vmatprep.subr.bf16.mxu0 %v686
        %699 = vmatpush1.bf16.msra.mxu0 %v683
        %700 = vmatprep.subr.bf16.mxu0 %v675
        %701 = vmatpush1.bf16.msra.mxu0 %v674
        %702 = vmatprep.subr.bf16.mxu0 %v673
        %703 = vmatpush1.bf16.msra.mxu0 %v672
        %704 = vmatprep.subr.bf16.mxu0 0
        %705 = vmatpush2.bf16.msra.mxu0 0
        %706 = vmatprep.subr.bf16.mxu0 0
        %707 = vmatpush2.bf16.msra.mxu0 0
        %708 = vmatprep.subr.bf16.mxu0 0
        %709 = vmatpush2.bf16.msra.mxu0 0
        %710 = vmatprep.subr.bf16.mxu0 0
        %711 = vmatpush2.bf16.msra.mxu0 0
        %712 = vmatprep.subr.bf16.mxu0 0
        %713 = vmatpush2.bf16.msra.mxu0 0
        %714 = vmatprep.subr.bf16.mxu0 0
        %715 = vmatpush2.bf16.msra.mxu0 0
        %716 = vmatprep.subr.bf16.mxu0 0
        %717 = vmatpush2.bf16.msra.mxu0 0
        %718 = vmatprep.subr.bf16.mxu0 0
        %719 = vmatpush2.bf16.msra.mxu0 0
        %720 = vmatprep.mubr.bf16.mxu0 0
        %721 = vmatmul.mubr.bf16.gmra.mxu0 %v680
        %v722 = vpop.f32.mrf.mxu0
        %v723 = vadd.f32 0.0, %v722
        %v724 = vpop.f32.mrf.mxu0
        %v725 = vadd.f32 0.0, %v724
        %v726 = vpop.f32.mrf.mxu0
        %v727 = vpop.f32.mrf.mxu0
        %728 = vdwg.mxu0
        %v729 = vld [vmem:[%s5] sm:$0xf]
        %731 = vset.pattern.permute.xlu0 0
        %732 = vperm.xlu0 %731, %v729
        %v733 = vpop.permute.xlu0 %732
        %v735 = vmul.f32 %v723, %v733
        %v736 = vmul.f32 %v725, %v733
        %v737 = vld [vmem:[%s6] sm:$0xf]
        %739 = vset.pattern.permute.xlu0 0
        %740 = vperm.xlu0 %739, %v737
        %v741 = vpop.permute.xlu0 %740
        %v743 = vadd.f32 %v735, %v741
        %v744 = vadd.f32 %v736, %v741
        %v745 = vld [vmem:[%s276] sm:$0xff]
        %v747 = vcombine.high %v745, %v745
        %v749 = vadd.f32 %v743, %v745
        %v750 = vadd.f32 %v744, %v747
        %v751 = vmax.f32 %v749, 0.0
        %v752 = vmax.f32 %v750, 0.0
        %v755 = vcombine.low %v751, %v752
        %757 = vst [vmem:[%s271] sm:$0xff] %v755
        %s758 = sand.u32 %s181, 1
        %s759 = scalar_lea.sflag [#allocation4], %s758
        %s760 = sand.u32 %s181, 1
        %s761 = smul.addr %s760, 8
        %s762 = scalar_lea.vmem [#allocation3], %s761
        // Predicated region
        $region49: #{tpu_custom_call.1} parent=47 // pred_check
          %p763 = pneg %p191
        $region50: #{tpu_custom_call.1} parent=47 // pred_check_branch
          %765 = sbr.rel (%p763) target = $region52
        $region51: #{tpu_custom_call.1} parent=47 // pred_region
          %s767 = ssub.s32 128, 128
          %768 = vsyncadd %s759, %s767
          %s769 = smul.addr %s21, 2
          %s770 = smul.addr %s769, 64
          %s771 = scalar_lea.hbm %s7, %s770
          %s773 = sshll.u32 %s762, 4
          %s774 = int_to_ptr.vmem [resolvable:$true] %s773
          %776 = dma.vmem_to_hbm [thread:$0]  %s774, 128, %s771, %s759
        $region52: #{tpu_custom_call.1} parent=47 // pred_fallthru
          _
      $region48: #{tpu_custom_call.1} parent=5 // pred_fallthru
        _
      %p777 = scmp.le.s32.totalorder 2, %s16
      // Predicated region
      $region53: #{tpu_custom_call.1} parent=5 // pred_check
        %p778 = pneg %p777
      $region54: #{tpu_custom_call.1} parent=5 // pred_check_branch
        %780 = sbr.rel (%p778) target = $region56
      $region55: #{tpu_custom_call.1} parent=5 // pred_region
        %s781 = ssub.s32 %s16, 2
        // Predicated region
        $region57: #{tpu_custom_call.1} parent=55 // pred_check
          %p782 = pneg %p197
        $region58: #{tpu_custom_call.1} parent=55 // pred_check_branch
          %784 = sbr.rel (%p782) target = $region60
        $region59: #{tpu_custom_call.1} parent=55 // pred_region
          %s785 = sand.u32 %s182, 1
          %s786 = scalar_lea.sflag [#allocation4], %s785
          %s787 = sand.u32 %s182, 1
          %s788 = smul.addr %s787, 8
          %s789 = scalar_lea.vmem [#allocation3], %s788
          %790 = dma.done %s786, 128
        $region60: #{tpu_custom_call.1} parent=55 // pred_fallthru
          _
      $region56: #{tpu_custom_call.1} parent=5 // pred_fallthru
        _
    $region6: #{tpu_custom_call.1} parent=1 // loop_footer
      %s20 = sadd.s32 1, %s16
    $region7: #{tpu_custom_call.1} parent=1 // loop_footer_branch
      %15 = sbr.rel target = $region3
    $region8: #{tpu_custom_call.1} parent=1 // loop_exit
      _
    %791 = vsyncpa [#allocation4], 1
    %s792 = scalar_lea.sflag [#allocation4], 1
    %793 = vsyncpa %s792, 1

</llo_original>
